<compile_context>
chip_gen: v6e
topology: v6e:2x2x1
jax: 0.10.0
libtpu: 0.0.40
codegen_flags: <defaults>
</compile_context>

<pallas_src>
import functools

import jax
import jax.numpy as jnp
from jax.experimental import pallas as pl
from jax.experimental.pallas import tpu as pltpu

_LANE = 128
_SUBLANE = 8


def _ts_nll_kernel(logits_ref, target_ref, partial_ref, *, inv_T, tile_n, n_rows):
    """One batch tile: fills a lane-dense (1, 8, 128) block with the tile's NLL sum."""
    i = pl.program_id(0)

    raw = logits_ref[...]                                   # (tile_n, C), native dtype
    c = raw.shape[1]

    # Row max + target gather in the native dtype (bf16 VALU on v6e/v7x).
    # (1, C) lane iota broadcasts against the (tile_n, 1) target column -> no
    # materialized (tile_n, C) int32 iota.
    m0 = jnp.max(raw, axis=1, keepdims=True)                       # (tile_n, 1)
    col = jax.lax.broadcasted_iota(jnp.int32, (1, c), 1)           # (1, C)
    onehot = col == target_ref[...]                                # (tile_n, C)
    zero = jnp.array(0, dtype=raw.dtype)
    x_tgt = jnp.sum(jnp.where(onehot, raw, zero), axis=1, keepdims=True)

    # Shifted exp / logsumexp in f32 with the temperature folded in after the
    # shift: nll = (m0 - x[t]) * invT + log(sum(exp((x - m0) * invT))).
    inv_t = jnp.float32(inv_T)
    m0f = m0.astype(jnp.float32)
    z = (raw.astype(jnp.float32) - m0f) * inv_t                    # (tile_n, C) f32
    lse = jnp.log(jnp.sum(jnp.exp(z), axis=1, keepdims=True))      # (tile_n, 1)
    per_row_nll = (m0f - x_tgt.astype(jnp.float32)) * inv_t + lse  # (tile_n, 1)

    # Mask padded rows of the boundary tile before reducing.
    row = jax.lax.broadcasted_iota(jnp.int32, (tile_n, 1), 0)
    valid = (i * tile_n + row) < n_rows
    tile_sum = jnp.sum(jnp.where(valid, per_row_nll, 0.0))

    # Lane-dense, unmasked store of the per-tile partial.
    partial_ref[...] = jnp.full(partial_ref.shape, tile_sum, dtype=jnp.float32)


def _vmem_capacity_bytes():
    """Generation-aware VMEM capacity; conservative (v7x per-TC) fallback."""
    default = 64 * 1024 * 1024
    try:
        info = pltpu.get_tpu_info()
        cap = int(getattr(info, "vmem_capacity_bytes", default))
        return cap if cap > 0 else default
    except Exception:
        return default


def _per_row_vmem_bytes(c, itemsize):
    """Conservative VMEM bytes per batch row held live inside the kernel."""
    c_pad = ((c + _LANE - 1) // _LANE) * _LANE
    logits = 2 * c_pad * itemsize        # native-dtype logits tile, double-buffered
    targets = 2 * 512                    # (tile_n,1) i32 block pads to a lane line / row, x2 bufs
    full_f32 = 3 * c_pad * 4             # f32 intermediates (exp arg / exp / one-hot select)
    columns = 4 * 512                    # (tile_n,1) column temps (m0, x_tgt, nll, mask)
    return logits + targets + full_f32 + columns


def _choose_tile_n(n, c, itemsize, vmem_cap):
    """Largest multiple-of-8 row tile fitting a ~4-8 MiB DMA target and the VMEM budget."""
    target_block_bytes = 8 * 1024 * 1024 if vmem_cap >= 100 * 1024 * 1024 else 4 * 1024 * 1024
    budget = int(vmem_cap * 0.55)        # headroom for outputs / compiler scratch / spills
    rows_vmem = budget // _per_row_vmem_bytes(c, itemsize)
    rows_dma = target_block_bytes // max(1, c * itemsize)
    rows = min(rows_vmem, rows_dma)
    rows = max(_SUBLANE, (rows // _SUBLANE) * _SUBLANE)
    n_pad8 = ((n + _SUBLANE - 1) // _SUBLANE) * _SUBLANE
    return int(min(rows, n_pad8))


def _vmem_limit_bytes(tile_n, c, itemsize, vmem_cap):
    """Scoped-VMEM limit derived from the actual buffer sum (not hard-coded)."""
    need = tile_n * _per_row_vmem_bytes(c, itemsize)
    need += 2 * _SUBLANE * _LANE * 4                      # double-buffered (1,8,128) partial out
    limit = int(need * 1.25) + (4 << 20)                  # margin for compiler scratch
    limit = max(limit, 32 << 20)
    limit = min(limit, int(vmem_cap * 0.9))
    return int(limit)


def temperature_scaled_nll_loss(logits, target, T: float = 1.0, tile_n=None):
    """Pallas TPU implementation of TemperatureScaledNLLLoss.forward.

    logits: (N, C) float array (any float dtype), target: (N,) int class ids.
    Returns the scalar float32 mean NLL of log_softmax(logits / T, axis=1).
    """
    n, c = logits.shape
    itemsize = jnp.dtype(logits.dtype).itemsize
    vmem_cap = _vmem_capacity_bytes()

    n_pad8 = ((n + _SUBLANE - 1) // _SUBLANE) * _SUBLANE
    if tile_n is None:
        tile_n = _choose_tile_n(n, c, itemsize, vmem_cap)
    else:
        tile_n = max(_SUBLANE, ((int(tile_n) + _SUBLANE - 1) // _SUBLANE) * _SUBLANE)
        tile_n = min(tile_n, n_pad8)
    num_tiles = (n + tile_n - 1) // tile_n

    target_2d = target.astype(jnp.int32).reshape(n, 1)

    kernel = functools.partial(
        _ts_nll_kernel, inv_T=float(1.0 / T), tile_n=tile_n, n_rows=n)

    partials = pl.pallas_call(
        kernel,
        out_shape=jax.ShapeDtypeStruct((num_tiles, _SUBLANE, _LANE), jnp.float32),
        grid=(num_tiles,),
        in_specs=[
            # logits: native dtype, full class row per tile (lane axis = C).
            pl.BlockSpec((tile_n, c), lambda i: (i, 0)),
            # targets: co-tiled (tile_n, 1) i32 block.
            pl.BlockSpec((tile_n, 1), lambda i: (i, 0)),
        ],
        # Lane-dense (1, 8, 128) f32 partial per grid step (unmasked vst).
        out_specs=pl.BlockSpec((1, _SUBLANE, _LANE), lambda i: (i, 0, 0)),
        compiler_params=pltpu.CompilerParams(
            dimension_semantics=("parallel",),
            vmem_limit_bytes=_vmem_limit_bytes(tile_n, c, itemsize, vmem_cap),
        ),
        cost_estimate=pl.CostEstimate(
            flops=6 * n * c,
            transcendentals=n * c + n,
            bytes_accessed=n * c * itemsize + n * 4
            + num_tiles * _SUBLANE * _LANE * 4,
        ),
    )(logits, target_2d)

    # Final reduce + mean in the wrapper (tiny: num_tiles elements).
    return jnp.sum(partials[:, 0, 0]) / jnp.float32(n)


def _reference(logits, target, T):
    x = logits.astype(jnp.float32) / T
    lp = jax.nn.log_softmax(x, axis=1)
    return -jnp.mean(lp[jnp.arange(logits.shape[0]), target])


if __name__ == "__main__":
    key = jax.random.PRNGKey(0)
    k1, k2 = jax.random.split(key)

    # Small shapes consistent with (N, C) logits; N=20 is deliberately NOT a
    # multiple of 8 so the padded-row masking path is exercised.
    N, C = 20, 128
    T = 2.5  # temperature (T=1.0 reduces to standard NLL)

    logits = jax.random.normal(k1, (N, C), dtype=jnp.float32)
    target = jax.random.randint(k2, (N,), 0, C, dtype=jnp.int32)
    ref = _reference(logits, target, T)

    # 1) Auto tile sizing: single padded tile, masking path.
    loss = temperature_scaled_nll_loss(logits, target, T=T)
    jax.block_until_ready(loss)
    assert jnp.allclose(loss, ref, atol=1e-5, rtol=1e-5), (loss, ref)

    # 2) Forced small tile: multi-tile grid + per-tile partial reduction path.
    loss_small = temperature_scaled_nll_loss(logits, target, T=T, tile_n=8)
    jax.block_until_ready(loss_small)
    assert jnp.allclose(loss_small, ref, atol=1e-5, rtol=1e-5), (loss_small, ref)

    # 3) bf16 logits: native-dtype max/gather path.
    logits_bf16 = logits.astype(jnp.bfloat16)
    loss_bf16 = temperature_scaled_nll_loss(logits_bf16, target, T=T)
    jax.block_until_ready(loss_bf16)
    ref_bf16 = _reference(logits_bf16, target, T)
    assert jnp.allclose(loss_bf16, ref_bf16, atol=1e-4, rtol=1e-3), (loss_bf16, ref_bf16)

    print("KERNEL_OK")
</pallas_src>

<mosaic_0001>
module attributes {stable_mosaic.version = 11 : i64} {
  func.func @_ts_nll_kernel(%arg0: i32, %arg1: memref<24x128xf32, #tpu.memory_space<vmem>>, %arg2: memref<24x1xi32, #tpu.memory_space<vmem>>, %arg3: memref<1x8x128xf32, #tpu.memory_space<vmem>>) attributes {dimension_semantics = [#tpu.dimension_semantics<parallel>], iteration_bounds = array<i64: 1>, scalar_prefetch = 0 : i64, scratch_operands = 0 : i64, tpu.core_type = #tpu.core_type<tc>, window_params = [{transform_indices = @transform_0, window_bounds = array<i64: 24, 128>}, {transform_indices = @transform_1, window_bounds = array<i64: 24, 1>}, {transform_indices = @transform_2, window_bounds = array<i64: 1, 8, 128>}]} {
    %c0 = arith.constant 0 : index
    %c0_0 = arith.constant 0 : index
    %0 = vector.load %arg1[%c0, %c0_0] : memref<24x128xf32, #tpu.memory_space<vmem>>, vector<24x128xf32>
    %cst = arith.constant dense<0xFF800000> : vector<24xf32>
    %1 = vector.multi_reduction <maximumf>, %0, %cst [1] : vector<24x128xf32> to vector<24xf32>
    %2 = vector.shape_cast %1 : vector<24xf32> to vector<24x1xf32>
    %3 = tpu.iota {dimensions = array<i32: 1>} : vector<1x128xi32>
    %c0_1 = arith.constant 0 : index
    %c0_2 = arith.constant 0 : index
    %4 = vector.load %arg2[%c0_1, %c0_2] : memref<24x1xi32, #tpu.memory_space<vmem>>, vector<24x1xi32>
    %5 = vector.broadcast %3 : vector<1x128xi32> to vector<24x128xi32>
    %6 = vector.broadcast %4 : vector<24x1xi32> to vector<24x128xi32>
    %7 = arith.cmpi eq, %5, %6 : vector<24x128xi32>
    %cst_3 = arith.constant 0.000000e+00 : f32
    %8 = vector.broadcast %cst_3 : f32 to vector<24x128xf32>
    %9 = arith.select %7, %0, %8 : vector<24x128xi1>, vector<24x128xf32>
    %cst_4 = arith.constant dense<0.000000e+00> : vector<24xf32>
    %10 = vector.multi_reduction <add>, %9, %cst_4 [1] : vector<24x128xf32> to vector<24xf32>
    %11 = vector.shape_cast %10 : vector<24xf32> to vector<24x1xf32>
    %12 = vector.broadcast %2 : vector<24x1xf32> to vector<24x128xf32>
    %13 = arith.subf %0, %12 : vector<24x128xf32>
    %cst_5 = arith.constant 4.000000e-01 : f32
    %14 = vector.broadcast %cst_5 : f32 to vector<24x128xf32>
    %15 = arith.mulf %13, %14 : vector<24x128xf32>
    %16 = math.exp %15 : vector<24x128xf32>
    %cst_6 = arith.constant dense<0.000000e+00> : vector<24xf32>
    %17 = vector.multi_reduction <add>, %16, %cst_6 [1] : vector<24x128xf32> to vector<24xf32>
    %18 = vector.shape_cast %17 : vector<24xf32> to vector<24x1xf32>
    %19 = math.log %18 : vector<24x1xf32>
    %20 = arith.subf %2, %11 : vector<24x1xf32>
    %cst_7 = arith.constant 4.000000e-01 : f32
    %21 = vector.broadcast %cst_7 : f32 to vector<24x1xf32>
    %22 = arith.mulf %20, %21 : vector<24x1xf32>
    %23 = arith.addf %22, %19 : vector<24x1xf32>
    %24 = tpu.iota {dimensions = array<i32: 0>} : vector<24x1xi32>
    %c24_i32 = arith.constant 24 : i32
    %25 = arith.muli %arg0, %c24_i32 : i32
    %26 = vector.broadcast %25 : i32 to vector<24x1xi32>
    %27 = arith.addi %26, %24 : vector<24x1xi32>
    %c20_i32 = arith.constant 20 : i32
    %28 = vector.broadcast %c20_i32 : i32 to vector<24x1xi32>
    %29 = arith.cmpi slt, %27, %28 : vector<24x1xi32>
    %cst_8 = arith.constant 0.000000e+00 : f32
    %30 = vector.broadcast %cst_8 : f32 to vector<24x1xf32>
    %31 = arith.select %29, %23, %30 : vector<24x1xi1>, vector<24x1xf32>
    %32 = vector.shape_cast %31 : vector<24x1xf32> to vector<1x24x1xf32>
    %cst_9 = arith.constant dense<0.000000e+00> : vector<1xf32>
    %33 = vector.multi_reduction <add>, %32, %cst_9 [1, 2] : vector<1x24x1xf32> to vector<1xf32>
    %34 = vector.shape_cast %33 : vector<1xf32> to vector<1x1x1xf32>
    %35 = vector.extract %34[0, 0, 0] : f32 from vector<1x1x1xf32>
    %36 = vector.broadcast %35 : f32 to vector<1x8x128xf32>
    %c0_10 = arith.constant 0 : index
    %c0_11 = arith.constant 0 : index
    %c0_12 = arith.constant 0 : index
    %37 = vector.load %arg3[%c0_10, %c0_11, %c0_12] : memref<1x8x128xf32, #tpu.memory_space<vmem>>, vector<1x8x128xf32>
    tpu.vector_store %arg3[%c0_10, %c0_11, %c0_12], %36 {strides = array<i32>} : memref<1x8x128xf32, #tpu.memory_space<vmem>>, vector<1x8x128xf32>,
    return
  }
  func.func @transform_0(%arg0: i32) -> (i32, i32) {
    %c0_i32 = arith.constant 0 : i32
    %c0_i32_0 = arith.constant 0 : i32
    return %arg0, %c0_i32 : i32, i32
  }
  func.func @transform_1(%arg0: i32) -> (i32, i32) {
    %c0_i32 = arith.constant 0 : i32
    %c0_i32_0 = arith.constant 0 : i32
    return %arg0, %c0_i32 : i32, i32
  }
  func.func @transform_2(%arg0: i32) -> (i32, i32, i32) {
    %c0_i32 = arith.constant 0 : i32
    %c0_i32_0 = arith.constant 0 : i32
    %c0_i32_1 = arith.constant 0 : i32
    return %arg0, %c0_i32, %c0_i32_0 : i32, i32, i32
  }
}

</mosaic_0001>

<llo_original>
// kernel: tpu_custom_call.1
$region0: #{tpu_custom_call.1}
  #allocation0 [shape = 'u32[]', space=smem, size = 0x4, offset = 0x4, fixed_abs, tag = 'smem constant byte address 0x4 - core index']
  #allocation1 [shape = 'u32[144,128]{1,0:T(1,128)}', space=vmem, size = 0x12000, scoped, tag = 'internal scratch']
  %s0 = inlined_call_operand.vmem [shape: f32[20,128], index: 0, kind: input, shape index: {}]
  %s1 = inlined_call_operand.vmem [shape: s32[20,1], index: 1, kind: input, shape index: {}]
  %s2 = inlined_call_operand.hbm [shape: f32[1,8,128], index: 2, kind: output, shape index: {}]
  %s3 = sld [smem:[#allocation0]]
  $region18: #{tpu_custom_call.1} parent=0
    _
  %s5 = ssub.s32 1, %s3
  %s6 = scalar_select 0, %s5, %s3
  $region1: #{tpu_custom_call.1} parent=0
    #allocation2 [shape = 'u8[4096]{0}', space=vmem, size = 0x1000, scoped, tag = 'output window, operand 0, single buffered']
    #allocation3 [shape = 's32[1]{0}', space=sflag, size = 0x4, scoped, tag = 'scoped memory for tpu_custom_call.1']
    %7 = vsyncpa [#allocation3], 0
    // Predicated region
    $region2: #{tpu_custom_call.1} parent=1 // pred_check
      _
    $region3: #{tpu_custom_call.1} parent=1 // pred_check_branch
      %9 = sbr.rel (0) target = $region5
    $region4: #{tpu_custom_call.1} parent=1 // pred_region
      _
    $region5: #{tpu_custom_call.1} parent=1 // pred_fallthru
      _
    // Predicated region
    $region6: #{tpu_custom_call.1} parent=1 // pred_check
      _
    $region7: #{tpu_custom_call.1} parent=1 // pred_check_branch
      %11 = sbr.rel (0) target = $region9
    $region8: #{tpu_custom_call.1} parent=1 // pred_region
      _
    $region9: #{tpu_custom_call.1} parent=1 // pred_fallthru
      _
    %v12 = vld [vmem:[%s0] sm:$0xff]
    %v13 = vld [vmem:[%s0 + $0x8] sm:$0xff]
    %v14 = vld [vmem:[%s0 + $0x10] sm:$0xff]
    %15 = vmax.xlane.f32.xlu0 %v12
    %v16 = vpop.xlane.xlu0 %15
    %17 = vmax.xlane.f32.xlu0 %v13
    %v18 = vpop.xlane.xlu0 %17
    %19 = vmax.xlane.f32.xlu0 %v14
    %v20 = vpop.xlane.xlu0 %19
    %v21 = vlaneseq
    %v22 = vand.u32 %v21, 127
    %v23 = vld [vmem:[%s1] sm:$0xff]
    %v24 = vld [vmem:[%s1 + $0x8] sm:$0xff]
    %v25 = vld [vmem:[%s1 + $0x10] sm:$0xff]
    %26 = vset.pattern.permute.xlu0 0
    %27 = vperm.xlu0 %26, %v23
    %v28 = vpop.permute.xlu0 %27
    %29 = vset.pattern.permute.xlu0 0
    %30 = vperm.xlu0 %29, %v24
    %v31 = vpop.permute.xlu0 %30
    %32 = vset.pattern.permute.xlu0 0
    %33 = vperm.xlu0 %32, %v25
    %v34 = vpop.permute.xlu0 %33
    %vm35 = vcmp.eq.s32.totalorder %v22, %v28
    %vm36 = vcmp.eq.s32.totalorder %v22, %v31
    %vm37 = vcmp.eq.s32.totalorder %v22, %v34
    %v38 = vsel %vm35, %v12, 0.0
    %v39 = vsel %vm36, %v13, 0.0
    %v40 = vsel %vm37, %v14, 0.0
    %41 = vadd.xlane.f32.xlu0 %v38
    %v42 = vpop.xlane.xlu0 %41
    %43 = vadd.xlane.f32.xlu0 %v39
    %v44 = vpop.xlane.xlu0 %43
    %45 = vadd.xlane.f32.xlu0 %v40
    %v46 = vpop.xlane.xlu0 %45
    %v47 = vsub.f32 %v12, %v16
    %v48 = vsub.f32 %v13, %v18
    %v49 = vsub.f32 %v14, %v20
    %v50 = vmul.f32 %v47, 0.4
    %v51 = vmul.f32 %v48, 0.4
    %v52 = vmul.f32 %v49, 0.4
    %v53 = vmul.f32 %v50, 1.442695
    %v54 = vpow.pop %v53
    %v55 = vmul.f32 %v51, 1.442695
    %v56 = vpow.pop %v55
    %v57 = vmul.f32 %v52, 1.442695
    %v58 = vpow.pop %v57
    %59 = vadd.xlane.f32.xlu0 %v54
    %v60 = vpop.xlane.xlu0 %59
    %61 = vadd.xlane.f32.xlu0 %v56
    %v62 = vpop.xlane.xlu0 %61
    %63 = vadd.xlane.f32.xlu0 %v58
    %v64 = vpop.xlane.xlu0 %63
    %v65 = vlog2.pop %v60
    %v66 = vmul.f32 %v65, 0.6931472
    %v67 = vlog2.pop %v62
    %v68 = vmul.f32 %v67, 0.6931472
    %v69 = vlog2.pop %v64
    %v70 = vmul.f32 %v69, 0.6931472
    %v71 = vsub.f32 %v16, %v42
    %v72 = vsub.f32 %v18, %v44
    %v73 = vsub.f32 %v20, %v46
    %v74 = vmul.f32 %v71, 0.4
    %v75 = vmul.f32 %v72, 0.4
    %v76 = vmul.f32 %v73, 0.4
    %v77 = vadd.f32 %v74, %v66
    %v78 = vadd.f32 %v75, %v68
    %v79 = vadd.f32 %v76, %v70
    %v80 = vlaneseq
    %v81 = vshrl.u32 %v80, 7
    %v82 = vadd.s32 %v81, 8
    %v83 = vadd.s32 %v81, 16
    %s84 = smul.u32 0, 24
    %v85 = vstv %s84
    %v86 = vadd.s32 %v85, %v81
    %v87 = vadd.s32 %v85, %v82
    %v88 = vadd.s32 %v85, %v83
    %vm89 = vcmp.lt.s32.totalorder %v86, 20
    %vm90 = vcmp.lt.s32.totalorder %v87, 20
    %vm91 = vcmp.lt.s32.totalorder %v88, 20
    %v92 = vsel %vm89, %v77, 0.0
    %v93 = vsel %vm90, %v78, 0.0
    %v94 = vsel %vm91, %v79, 0.0
    %vm95 = vcmask 7168
    %v96 = vsel %vm95, %v92, 0.0
    %v97 = vsel %vm95, %v93, 0.0
    %v98 = vadd.f32 %v96, %v97
    %v99 = vsel %vm95, %v94, 0.0
    %v100 = vadd.f32 %v98, %v99
    %101 = vadd.xlane.f32.xlu0 %v100
    %v102 = vpop.xlane.xlu0 %101
    %v103 = vrot.slane %v102, 4
    %v104 = vadd.f32 %v102, %v103
    %v105 = vrot.slane %v104, 2
    %v106 = vadd.f32 %v104, %v105
    %v107 = vrot.slane %v106, 1
    %v108 = vadd.f32 %v106, %v107
    %s109 = vtos %v108
    %v110 = vstv %s109
    %111 = vst [vmem:[#allocation2] sm:$0xff] %v110
    // Predicated region
    $region10: #{tpu_custom_call.1} parent=1 // pred_check
      _
    $region11: #{tpu_custom_call.1} parent=1 // pred_check_branch
      %113 = sbr.rel (0) target = $region13
    $region12: #{tpu_custom_call.1} parent=1 // pred_region
      %s115 = ssub.s32 128, 128
      %116 = vsyncadd [#allocation3], %s115
      %s118 = sshll.u32 [#allocation2], 4
      %s119 = int_to_ptr.vmem [resolvable:$true] %s118
      %121 = dma.vmem_to_hbm [thread:$0]  %s119, 128, %s2, [#allocation3]
    $region13: #{tpu_custom_call.1} parent=1 // pred_fallthru
      _
    // Predicated region
    $region14: #{tpu_custom_call.1} parent=1 // pred_check
      _
    $region15: #{tpu_custom_call.1} parent=1 // pred_check_branch
      %123 = sbr.rel (0) target = $region17
    $region16: #{tpu_custom_call.1} parent=1 // pred_region
      %124 = dma.done [#allocation3], 128
    $region17: #{tpu_custom_call.1} parent=1 // pred_fallthru
      _
    %125 = vsyncpa [#allocation3], 1

</llo_original>
